<compile_context>
chip_gen: v5e
topology: v5e:2x2
jax: 0.10.0
libtpu: 0.0.40
codegen_flags: <defaults>
</compile_context>

<pallas_src>
import jax
import jax.numpy as jnp
from jax.experimental import pallas as pl
from jax.experimental.pallas import tpu as pltpu


def _convt_silu_kernel(w_ref, b_ref, x_ref, o_ref):
    # w_ref: SMEM (Cin,)   b_ref: SMEM (1,)
    # x_ref: VMEM (1, Cin, TS)   o_ref: VMEM (1, 1, TS)
    cin = x_ref.shape[1]
    acc = x_ref[0, 0:1, :] * w_ref[0]          # (1, TS)  VPU broadcast-mul
    for c in range(1, cin):                    # unrolled: Cin is static (4)
        acc = acc + x_ref[0, c:c + 1, :] * w_ref[c]
    v1 = acc + b_ref[0]
    o_ref[0] = (v1 * jax.nn.sigmoid(v1)).astype(o_ref.dtype)


def conv_transpose3d_k1_silu(x, weight, bias, padding=1):
    """x: (N, Cin, D, H, W). weight: (Cin, Cout, 1, 1, 1). bias: (Cout,)."""
    n, cin, d, h, w = x.shape
    cout = weight.shape[1]
    assert cout == 1, "kernel specialised for the module's Cout=1"
    p = padding
    do, ho, wo = d - 2 * p, h - 2 * p, w - 2 * p
    assert do > 0 and ho > 0 and wo > 0, "padding too large for input"
    s = do * ho * wo

    # Crop + flatten spatial, channels stay leading (NO channels-last transpose).
    x_flat = x[:, :, p:d - p, p:h - p, p:w - p].reshape(n, cin, s)

    # Lane-dense tiling of the flattened spatial dim.
    LANE = 128
    MAX_TS = 2048
    if s <= MAX_TS:
        ts = ((s + LANE - 1) // LANE) * LANE          # single tile along S
    else:
        ts = MAX_TS
    s_pad = ((s + ts - 1) // ts) * ts
    if s_pad != s:
        x_flat = jnp.pad(x_flat, ((0, 0), (0, 0), (0, s_pad - s)))

    w_vec = weight.reshape(cin).astype(x.dtype)        # (Cin,)  -> SMEM
    b_vec = bias.reshape(1).astype(x.dtype)            # (1,)    -> SMEM

    grid = (n, s_pad // ts)

    out = pl.pallas_call(
        _convt_silu_kernel,
        out_shape=jax.ShapeDtypeStruct((n, 1, s_pad), x.dtype),
        grid=grid,
        in_specs=[
            pl.BlockSpec(memory_space=pltpu.MemorySpace.SMEM),       # weights
            pl.BlockSpec(memory_space=pltpu.MemorySpace.SMEM),       # bias
            pl.BlockSpec((1, cin, ts), lambda i, j: (i, 0, j)),      # x tile
        ],
        out_specs=pl.BlockSpec((1, 1, ts), lambda i, j: (i, 0, j)),
        compiler_params=pltpu.CompilerParams(
            dimension_semantics=("parallel", "parallel")),
    )(w_vec, b_vec, x_flat)

    # Strip padding and restore NCDHW.
    return out[:, :, :s].reshape(n, cout, do, ho, wo)


def _reference(x, weight, bias, padding=1):
    n, cin, d, h, w = x.shape
    cout = weight.shape[1]
    p = padding
    xc = x[:, :, p:d - p, p:h - p, p:w - p]
    w2 = weight.reshape(cin, cout)
    v1 = jnp.einsum('ncdhw,co->nodhw', xc, w2) + bias.reshape(1, cout, 1, 1, 1)
    return v1 * jax.nn.sigmoid(v1)


if __name__ == "__main__":
    key = jax.random.PRNGKey(0)
    kx, kw, kb = jax.random.split(key, 3)

    # Input consistent with the module: Cin = 4. Spatial = 6 so the cropped
    # output is (N, 1, 4, 4, 4).
    N, CIN, COUT, D, H, W = 2, 4, 1, 6, 6, 6
    x = jax.random.normal(kx, (N, CIN, D, H, W), dtype=jnp.float32)

    # ConvTranspose3d weight shape: (in_channels, out_channels, kD, kH, kW)
    fan = CIN  # kernel volume = 1
    bound = 1.0 / (fan ** 0.5)
    weight = jax.random.uniform(kw, (CIN, COUT, 1, 1, 1),
                                minval=-bound, maxval=bound, dtype=jnp.float32)
    bias = jax.random.uniform(kb, (COUT,), minval=-bound, maxval=bound,
                              dtype=jnp.float32)

    out = conv_transpose3d_k1_silu(x, weight, bias, padding=1)
    out = jax.block_until_ready(out)

    ref = _reference(x, weight, bias, padding=1)
    assert out.shape == (N, COUT, D - 2, H - 2, W - 2)
    assert jnp.allclose(out, ref, atol=1e-5, rtol=1e-5)

    print("KERNEL_OK")
</pallas_src>

<mosaic_0001>
module attributes {stable_mosaic.version = 11 : i64} {
  func.func @_convt_silu_kernel(%arg0: i32, %arg1: i32, %arg2: memref<4xf32, #tpu.memory_space<smem>>, %arg3: memref<1xf32, #tpu.memory_space<smem>>, %arg4: memref<1x4x128xf32, #tpu.memory_space<vmem>>, %arg5: memref<1x1x128xf32, #tpu.memory_space<vmem>>) attributes {dimension_semantics = [#tpu.dimension_semantics<parallel>, #tpu.dimension_semantics<parallel>], iteration_bounds = array<i64: 2, 1>, scalar_prefetch = 0 : i64, scratch_operands = 0 : i64, tpu.core_type = #tpu.core_type<tc>, window_params = [{transform_indices = @transform_0, window_bounds = array<i64: 4>}, {transform_indices = @transform_1, window_bounds = array<i64: 1>}, {transform_indices = @transform_2, window_bounds = array<i64: 1, 4, 128>}, {transform_indices = @transform_3, window_bounds = array<i64: 1, 1, 128>}]} {
    %c0 = arith.constant 0 : index
    %c0_0 = arith.constant 0 : index
    %c0_1 = arith.constant 0 : index
    %0 = vector.load %arg4[%c0, %c0_0, %c0_1] : memref<1x4x128xf32, #tpu.memory_space<vmem>>, vector<1x1x128xf32>
    %1 = vector.shape_cast %0 : vector<1x1x128xf32> to vector<1x128xf32>
    %c0_2 = arith.constant 0 : index
    %2 = memref.load %arg2[%c0_2] : memref<4xf32, #tpu.memory_space<smem>>
    %3 = vector.broadcast %2 : f32 to vector<1x128xf32>
    %4 = arith.mulf %1, %3 : vector<1x128xf32>
    %c0_3 = arith.constant 0 : index
    %c1 = arith.constant 1 : index
    %c0_4 = arith.constant 0 : index
    %5 = vector.load %arg4[%c0_3, %c1, %c0_4] : memref<1x4x128xf32, #tpu.memory_space<vmem>>, vector<1x1x128xf32>
    %6 = vector.shape_cast %5 : vector<1x1x128xf32> to vector<1x128xf32>
    %c1_5 = arith.constant 1 : index
    %7 = memref.load %arg2[%c1_5] : memref<4xf32, #tpu.memory_space<smem>>
    %8 = vector.broadcast %7 : f32 to vector<1x128xf32>
    %9 = arith.mulf %6, %8 : vector<1x128xf32>
    %10 = arith.addf %4, %9 : vector<1x128xf32>
    %c0_6 = arith.constant 0 : index
    %c2 = arith.constant 2 : index
    %c0_7 = arith.constant 0 : index
    %11 = vector.load %arg4[%c0_6, %c2, %c0_7] : memref<1x4x128xf32, #tpu.memory_space<vmem>>, vector<1x1x128xf32>
    %12 = vector.shape_cast %11 : vector<1x1x128xf32> to vector<1x128xf32>
    %c2_8 = arith.constant 2 : index
    %13 = memref.load %arg2[%c2_8] : memref<4xf32, #tpu.memory_space<smem>>
    %14 = vector.broadcast %13 : f32 to vector<1x128xf32>
    %15 = arith.mulf %12, %14 : vector<1x128xf32>
    %16 = arith.addf %10, %15 : vector<1x128xf32>
    %c0_9 = arith.constant 0 : index
    %c3 = arith.constant 3 : index
    %c0_10 = arith.constant 0 : index
    %17 = vector.load %arg4[%c0_9, %c3, %c0_10] : memref<1x4x128xf32, #tpu.memory_space<vmem>>, vector<1x1x128xf32>
    %18 = vector.shape_cast %17 : vector<1x1x128xf32> to vector<1x128xf32>
    %c3_11 = arith.constant 3 : index
    %19 = memref.load %arg2[%c3_11] : memref<4xf32, #tpu.memory_space<smem>>
    %20 = vector.broadcast %19 : f32 to vector<1x128xf32>
    %21 = arith.mulf %18, %20 : vector<1x128xf32>
    %22 = arith.addf %16, %21 : vector<1x128xf32>
    %c0_12 = arith.constant 0 : index
    %23 = memref.load %arg3[%c0_12] : memref<1xf32, #tpu.memory_space<smem>>
    %24 = vector.broadcast %23 : f32 to vector<1x128xf32>
    %25 = arith.addf %22, %24 : vector<1x128xf32>
    %26 = arith.negf %25 : vector<1x128xf32>
    %27 = math.exp %26 : vector<1x128xf32>
    %cst = arith.constant 1.000000e+00 : f32
    %28 = vector.broadcast %cst : f32 to vector<1x128xf32>
    %29 = arith.addf %28, %27 : vector<1x128xf32>
    %30 = arith.divf %28, %29 : vector<1x128xf32>
    %31 = arith.mulf %25, %30 : vector<1x128xf32>
    %c0_13 = arith.constant 0 : index
    %c0_14 = arith.constant 0 : index
    %c0_15 = arith.constant 0 : index
    %32 = vector.load %arg5[%c0_13, %c0_14, %c0_15] : memref<1x1x128xf32, #tpu.memory_space<vmem>>, vector<1x1x128xf32>
    %33 = vector.shape_cast %32 : vector<1x1x128xf32> to vector<1x128xf32>
    %34 = vector.shape_cast %31 : vector<1x128xf32> to vector<1x1x128xf32>
    tpu.vector_store %arg5[%c0_13, %c0_14, %c0_15], %34 {strides = array<i32>} : memref<1x1x128xf32, #tpu.memory_space<vmem>>, vector<1x1x128xf32>,
    return
  }
  func.func @transform_0(%arg0: i32, %arg1: i32) -> i32 {
    %c0_i32 = arith.constant 0 : i32
    %c0_i32_0 = arith.constant 0 : i32
    return %c0_i32 : i32
  }
  func.func @transform_1(%arg0: i32, %arg1: i32) -> i32 {
    %c0_i32 = arith.constant 0 : i32
    %c0_i32_0 = arith.constant 0 : i32
    return %c0_i32 : i32
  }
  func.func @transform_2(%arg0: i32, %arg1: i32) -> (i32, i32, i32) {
    %c0_i32 = arith.constant 0 : i32
    %c0_i32_0 = arith.constant 0 : i32
    return %arg0, %c0_i32, %arg1 : i32, i32, i32
  }
  func.func @transform_3(%arg0: i32, %arg1: i32) -> (i32, i32, i32) {
    %c0_i32 = arith.constant 0 : i32
    %c0_i32_0 = arith.constant 0 : i32
    return %arg0, %c0_i32, %arg1 : i32, i32, i32
  }
}

</mosaic_0001>

<llo_original>
// kernel: tpu_custom_call.1
$region0: #{tpu_custom_call.1}
  #allocation0 [shape = 'u32[]', space=smem, size = 0x4, offset = 0x4, fixed_abs, tag = 'smem constant byte address 0x4 - core index']
  #allocation1 [shape = 'u32[72,128]{1,0:T(1,128)}', space=vmem, size = 0x9000, scoped, tag = 'internal scratch']
  #allocation2 [shape = 'f32[1]{0:T(128)S(6)}', space=smem, size = 0x200, scoped, tag = 'scoped memory for tpu_custom_call.1']
  %s0 = inlined_call_operand.vmem [shape: f32[4], index: 0, kind: input, shape index: {}]
  %s1 = inlined_call_operand.<no memory space> [shape: f32[1], index: 1, kind: input, shape index: {}]
  %s2 = inlined_call_operand.hbm [shape: f32[2,4,128], index: 2, kind: input, shape index: {}]
  %s3 = inlined_call_operand.hbm [shape: f32[2,1,128], index: 3, kind: output, shape index: {}]
  %s4 = sld [smem:[#allocation0]]
  $region53: #{tpu_custom_call.1} parent=0
    _
  %s6 = ssub.s32 1, %s4
  %s7 = scalar_select 0, %s6, %s4
  %8 = sst [smem:[#allocation2]] %s1
  $region1: #{tpu_custom_call.1} parent=0
    #allocation3 [shape = 'u8[512]{0}', space=smem, size = 0x200, scoped, tag = 'input window, operand 0, single buffered']
    #allocation4 [shape = 's32[2]{0}', space=sflag, size = 0x8, scoped, tag = 'scoped memory for tpu_custom_call.1']
    #allocation5 [shape = 's32[2]{0}', space=sflag, size = 0x8, scoped, tag = 'scoped memory for tpu_custom_call.1']
    #allocation6 [shape = 's32[2]{0}', space=sflag, size = 0x8, scoped, tag = 'scoped memory for tpu_custom_call.1']
    #allocation7 [shape = 'u8[4096]{0}', space=vmem, size = 0x1000, scoped, tag = 'input window, operand 2']
    #allocation8 [shape = 'u8[1024]{0}', space=vmem, size = 0x400, scoped, tag = 'output window, operand 0']
    %9 = vsyncpa [#allocation6], 0
    %10 = vsyncpa [#allocation4], 0
    %s11 = scalar_lea.sflag [#allocation4], 1
    %12 = vsyncpa %s11, 0
    %13 = vsyncpa [#allocation5], 0
    %s14 = scalar_lea.sflag [#allocation5], 1
    %15 = vsyncpa %s14, 0
    loop: start=0, step=1, limit=4
    $region2: #{tpu_custom_call.1} parent=1 // loop_pre_header
      _
    $region3: #{tpu_custom_call.1} parent=1 // loop_header
      %s17 = sphi 0, %s21
      %p18 = scmp.ge.s32.totalorder %s17, 4
      %s24 = sphi 0, %s36
      %s25 = sphi 0, %s32
      %s26 = sphi 0, %s24
      %s27 = sphi 0, %s25
      %s28 = sphi 0, %s26
      %s29 = sphi 0, %s27
      %s37 = sphi 0, %s37
      %s39 = sphi 0, %s37
      %s40 = sphi 0, %s39
      %s54 = sphi 0, %s40
      %s58 = sphi 0, %s58
      %s60 = sphi 0, %s58
      %s61 = sphi 0, %s60
      %s75 = sphi 0, %s61
      %s83 = sphi 0, %s85
      %s86 = sphi 0, %s83
      %s87 = sphi 0, %s86
      %s103 = sphi 0, %s87
      %s111 = sphi 0, %s113
      %s114 = sphi 0, %s111
      %s115 = sphi 0, %s114
      %s131 = sphi 0, %s115
    $region4: #{tpu_custom_call.1} parent=1 // loop_header_branch
      %20 = sbr.rel (%p18) target = $region8
    $region5: #{tpu_custom_call.1} parent=1 // loop_body
      %s22 = ssub.s32 %s17, 1
      %s23 = ssub.s32 %s17, 2
      %s30 = sadd.s32 1, %s25
      %p31 = scmp.ge.s32.totalorder %s30, 1
      %s32 = scalar_select %p31, 0, %s30
      %s33 = sadd.s32 1, %s24
      %s34 = scalar_select %p31, %s33, %s24
      %p35 = scmp.ge.s32.totalorder %s34, 2
      %s36 = scalar_select %p35, 0, %s34
      %s38 = sadd.s32 %s37, 1
      %p41 = scmp.eq.s32.totalorder %s17, 1
      %p42 = scmp.ne.s32.totalorder %s37, %s39
      %p43 = scmp.eq.s32.totalorder %s17, 0
      %p44 = por %p42, %p43
      %p45 = scmp.ne.s32.totalorder %s37, %s39
      %p46 = scmp.eq.s32.totalorder %s22, 1
      %p47 = por %p45, %p46
      %p48 = scmp.ne.s32.totalorder %s39, %s40
      %p49 = scmp.eq.s32.totalorder %s22, 0
      %p50 = por %p48, %p49
      %p51 = scmp.ne.s32.totalorder %s39, %s40
      %p52 = scmp.eq.s32.totalorder %s23, 1
      %p53 = por %p51, %p52
      %p55 = scmp.ne.s32.totalorder %s40, %s54
      %p56 = scmp.eq.s32.totalorder %s23, 0
      %p57 = por %p55, %p56
      %s59 = sadd.s32 %s58, 1
      %p62 = scmp.eq.s32.totalorder %s17, 1
      %p63 = scmp.ne.s32.totalorder %s58, %s60
      %p64 = scmp.eq.s32.totalorder %s17, 0
      %p65 = por %p63, %p64
      %p66 = scmp.ne.s32.totalorder %s58, %s60
      %p67 = scmp.eq.s32.totalorder %s22, 1
      %p68 = por %p66, %p67
      %p69 = scmp.ne.s32.totalorder %s60, %s61
      %p70 = scmp.eq.s32.totalorder %s22, 0
      %p71 = por %p69, %p70
      %p72 = scmp.ne.s32.totalorder %s60, %s61
      %p73 = scmp.eq.s32.totalorder %s23, 1
      %p74 = por %p72, %p73
      %p76 = scmp.ne.s32.totalorder %s61, %s75
      %p77 = scmp.eq.s32.totalorder %s23, 0
      %p78 = por %p76, %p77
      %s79 = ssub.s32 %s24, %s36
      %s80 = ssub.s32 %s25, %s32
      %s81 = sor.u32 %s79, %s80
      %p82 = scmp.eq.s32.totalorder %s81, 0
      %s84 = sadd.s32 %s83, 1
      %s85 = scalar_select %p82, %s83, %s84
      %p88 = pneg %p82
      %p89 = scmp.eq.s32.totalorder %s17, 1
      %p90 = por %p88, %p89
      %p91 = scmp.ne.s32.totalorder %s83, %s86
      %p92 = scmp.eq.s32.totalorder %s17, 0
      %p93 = por %p91, %p92
      %p94 = scmp.ne.s32.totalorder %s83, %s86
      %p95 = scmp.eq.s32.totalorder %s22, 1
      %p96 = por %p94, %p95
      %p97 = scmp.ne.s32.totalorder %s86, %s87
      %p98 = scmp.eq.s32.totalorder %s22, 0
      %p99 = por %p97, %p98
      %p100 = scmp.ne.s32.totalorder %s86, %s87
      %p101 = scmp.eq.s32.totalorder %s23, 1
      %p102 = por %p100, %p101
      %p104 = scmp.ne.s32.totalorder %s87, %s103
      %p105 = scmp.eq.s32.totalorder %s23, 0
      %p106 = por %p104, %p105
      %s107 = ssub.s32 %s24, %s36
      %s108 = ssub.s32 %s25, %s32
      %s109 = sor.u32 %s107, %s108
      %p110 = scmp.eq.s32.totalorder %s109, 0
      %s112 = sadd.s32 %s111, 1
      %s113 = scalar_select %p110, %s111, %s112
      %p116 = pneg %p110
      %p117 = scmp.eq.s32.totalorder %s17, 1
      %p118 = por %p116, %p117
      %p119 = scmp.ne.s32.totalorder %s111, %s114
      %p120 = scmp.eq.s32.totalorder %s17, 0
      %p121 = por %p119, %p120
      %p122 = scmp.ne.s32.totalorder %s111, %s114
      %p123 = scmp.eq.s32.totalorder %s22, 1
      %p124 = por %p122, %p123
      %p125 = scmp.ne.s32.totalorder %s114, %s115
      %p126 = scmp.eq.s32.totalorder %s22, 0
      %p127 = por %p125, %p126
      %p128 = scmp.ne.s32.totalorder %s114, %s115
      %p129 = scmp.eq.s32.totalorder %s23, 1
      %p130 = por %p128, %p129
      %p132 = scmp.ne.s32.totalorder %s115, %s131
      %p133 = scmp.eq.s32.totalorder %s23, 0
      %p134 = por %p132, %p133
      %p135 = scmp.le.s32.totalorder 1, %s17
      %p136 = scmp.lt.s32.totalorder %s17, 3
      %p137 = pnand %p135, %p136
      %p138 = pneg %p137
      // Predicated region
      $region9: #{tpu_custom_call.1} parent=5 // pred_check
        _
      $region10: #{tpu_custom_call.1} parent=5 // pred_check_branch
        %140 = sbr.rel (%p137) target = $region12
      $region11: #{tpu_custom_call.1} parent=5 // pred_region
        %s141 = ssub.s32 %s17, 1
        // Predicated region
        $region13: #{tpu_custom_call.1} parent=11 // pred_check
          %p142 = pneg %p50
        $region14: #{tpu_custom_call.1} parent=11 // pred_check_branch
          %144 = sbr.rel (%p142) target = $region16
        $region15: #{tpu_custom_call.1} parent=11 // pred_region
          %146 = vsyncadd [#allocation6], 0
          %s148 = sshll.u32 %s0, 4
          %s149 = int_to_ptr.vmem [resolvable:$true] %s148
          %151 = dma.vmem_to_smem %s149, 16, [#allocation3], [#allocation6]
        $region16: #{tpu_custom_call.1} parent=11 // pred_fallthru
          _
        // Predicated region
        $region17: #{tpu_custom_call.1} parent=11 // pred_check
          %p152 = pneg %p71
        $region18: #{tpu_custom_call.1} parent=11 // pred_check_branch
          %154 = sbr.rel (%p152) target = $region20
        $region19: #{tpu_custom_call.1} parent=11 // pred_region
          _
        $region20: #{tpu_custom_call.1} parent=11 // pred_fallthru
          _
      $region12: #{tpu_custom_call.1} parent=5 // pred_fallthru
        _
      %p155 = scmp.lt.s32.totalorder %s17, 2
      // Predicated region
      $region21: #{tpu_custom_call.1} parent=5 // pred_check
        %p156 = pneg %p155
      $region22: #{tpu_custom_call.1} parent=5 // pred_check_branch
        %158 = sbr.rel (%p156) target = $region24
      $region23: #{tpu_custom_call.1} parent=5 // pred_region
        // Predicated region
        $region25: #{tpu_custom_call.1} parent=23 // pred_check
          %p159 = pneg %p93
        $region26: #{tpu_custom_call.1} parent=23 // pred_check_branch
          %161 = sbr.rel (%p159) target = $region28
        $region27: #{tpu_custom_call.1} parent=23 // pred_region
          %s162 = sand.u32 %s83, 1
          %s163 = scalar_lea.sflag [#allocation4], %s162
          %s164 = sand.u32 %s83, 1
          %s165 = smul.addr %s164, 4
          %s166 = scalar_lea.vmem [#allocation7], %s165
          %168 = vsyncadd %s163, 0
          %s169 = sadd.s32 %s25, %s24
          %s170 = smul.addr %s169, 4
          %s171 = scalar_lea.hbm %s2, %s170
          %s173 = sshll.u32 %s171, 4
          %s174 = int_to_ptr.hbm [resolvable:$true] %s173
          %s175 = sshll.u32 %s166, 4
          %s176 = int_to_ptr.vmem [resolvable:$true] %s175
          %178 = dma.hbm_to_vmem [thread:$0]  %s174, 64, %s176, %s163
        $region28: #{tpu_custom_call.1} parent=23 // pred_fallthru
          _
      $region24: #{tpu_custom_call.1} parent=5 // pred_fallthru
        _
      %p179 = scmp.le.s32.totalorder 1, %s17
      %p180 = scmp.lt.s32.totalorder %s17, 3
      %p181 = pnand %p179, %p180
      %p182 = pneg %p181
      // Predicated region
      $region29: #{tpu_custom_call.1} parent=5 // pred_check
        _
      $region30: #{tpu_custom_call.1} parent=5 // pred_check_branch
        %184 = sbr.rel (%p181) target = $region32
      $region31: #{tpu_custom_call.1} parent=5 // pred_region
        %s185 = ssub.s32 %s17, 1
        // Predicated region
        $region33: #{tpu_custom_call.1} parent=31 // pred_check
          %p186 = pneg %p50
        $region34: #{tpu_custom_call.1} parent=31 // pred_check_branch
          %188 = sbr.rel (%p186) target = $region36
        $region35: #{tpu_custom_call.1} parent=31 // pred_region
          %190 = dma.done [#allocation6], 16
        $region36: #{tpu_custom_call.1} parent=31 // pred_fallthru
          _
        %s191 = sand.u32 %s86, 1
        %s192 = scalar_lea.sflag [#allocation4], %s191
        %s193 = sand.u32 %s86, 1
        %s194 = smul.addr %s193, 4
        %s195 = scalar_lea.vmem [#allocation7], %s194
        // Predicated region
        $region37: #{tpu_custom_call.1} parent=31 // pred_check
          %p196 = pneg %p99
        $region38: #{tpu_custom_call.1} parent=31 // pred_check_branch
          %198 = sbr.rel (%p196) target = $region40
        $region39: #{tpu_custom_call.1} parent=31 // pred_region
          %200 = dma.done %s192, 64
        $region40: #{tpu_custom_call.1} parent=31 // pred_fallthru
          _
        %201 = sfence
        %p202 = pneg %p50
        %p203 = pneg %p47
        %p204 = pneg %p71
        %p205 = pneg %p68
        %s206 = sand.u32 %s86, 1
        %s207 = scalar_lea.sflag [#allocation4], %s206
        %s208 = sand.u32 %s86, 1
        %s209 = smul.addr %s208, 4
        %s210 = scalar_lea.vmem [#allocation7], %s209
        %p211 = pneg %p99
        %p212 = pneg %p96
        %p213 = pneg %p127
        %p214 = pneg %p124
        %s215 = sand.u32 %s114, 1
        %s216 = scalar_lea.sflag [#allocation5], %s215
        %s217 = sand.u32 %s114, 1
        %s218 = scalar_lea.vmem [#allocation8], %s217
        %v219 = vld [vmem:[%s195] sm:$0x1]
        %s220 = sld [smem:[#allocation3]]
        %v221 = vstv %s220
        %v222 = vmul.f32 %v219, %v221
        %v223 = vld [vmem:[%s195 + $0x1] sm:$0x1]
        %s224 = sld [smem:[#allocation3 + $0x1]]
        %v225 = vstv %s224
        %v226 = vmul.f32 %v223, %v225
        %v227 = vadd.f32 %v222, %v226
        %v228 = vld [vmem:[%s195 + $0x2] sm:$0x1]
        %s229 = sld [smem:[#allocation3 + $0x2]]
        %v230 = vstv %s229
        %v231 = vmul.f32 %v228, %v230
        %v232 = vadd.f32 %v227, %v231
        %v233 = vld [vmem:[%s195 + $0x3] sm:$0x1]
        %s234 = sld [smem:[#allocation3 + $0x3]]
        %v235 = vstv %s234
        %v236 = vmul.f32 %v233, %v235
        %v237 = vadd.f32 %v232, %v236
        %s238 = sld [smem:[#allocation2]]
        %v239 = vstv %s238
        %v240 = vadd.f32 %v237, %v239
        %v241 = vxor.u32 %v240, 2147483648
        %v242 = vmul.f32 %v241, 1.442695
        %v243 = vpow.pop %v242
        %v244 = vadd.f32 %v243, 1.0
        %v245 = vrcp.pop %v244
        %v246 = vmul.f32 %v244, %v245
        %v247 = vsub.f32 1.0, %v246
        %v248 = vmul.f32 %v245, %v247
        %v249 = vadd.f32 %v245, %v248
        %vm250 = vweird.f32 %v244
        %vm251 = vweird.f32 %v245
        %vm252 = vmor %vm250, %vm251
        %v253 = vsel %vm252, %v245, %v249
        %v254 = vand.u32 2147483647, %v244
        %vm255 = vcmp.eq.f32.partialorder %v254, 8.507059e+37
        %v256 = vand.u32 %v244, 2147483648
        %v257 = vor.u32 1.1754944e-38, %v256
        %v258 = vsel %vm255, %v257, %v253
        %v259 = vmul.f32 1.0, %v258
        %v260 = vmul.f32 %v240, %v259
        %261 = vst [vmem:[%s218] sm:$0x1] %v260
        %s262 = sand.u32 %s114, 1
        %s263 = scalar_lea.sflag [#allocation5], %s262
        %s264 = sand.u32 %s114, 1
        %s265 = scalar_lea.vmem [#allocation8], %s264
        // Predicated region
        $region41: #{tpu_custom_call.1} parent=31 // pred_check
          %p266 = pneg %p124
        $region42: #{tpu_custom_call.1} parent=31 // pred_check_branch
          %268 = sbr.rel (%p266) target = $region44
        $region43: #{tpu_custom_call.1} parent=31 // pred_region
          %270 = vsyncadd %s263, 0
          %s271 = sadd.s32 %s27, %s26
          %s272 = scalar_lea.hbm %s3, %s271
          %s274 = sshll.u32 %s265, 4
          %s275 = int_to_ptr.vmem [resolvable:$true] %s274
          %s276 = sshll.u32 %s272, 4
          %s277 = int_to_ptr.hbm [resolvable:$true] %s276
          %279 = dma.vmem_to_hbm [thread:$0]  %s275, 16, %s277, %s263
        $region44: #{tpu_custom_call.1} parent=31 // pred_fallthru
          _
      $region32: #{tpu_custom_call.1} parent=5 // pred_fallthru
        _
      %p280 = scmp.le.s32.totalorder 2, %s17
      // Predicated region
      $region45: #{tpu_custom_call.1} parent=5 // pred_check
        %p281 = pneg %p280
      $region46: #{tpu_custom_call.1} parent=5 // pred_check_branch
        %283 = sbr.rel (%p281) target = $region48
      $region47: #{tpu_custom_call.1} parent=5 // pred_region
        %s284 = ssub.s32 %s17, 2
        // Predicated region
        $region49: #{tpu_custom_call.1} parent=47 // pred_check
          %p285 = pneg %p130
        $region50: #{tpu_custom_call.1} parent=47 // pred_check_branch
          %287 = sbr.rel (%p285) target = $region52
        $region51: #{tpu_custom_call.1} parent=47 // pred_region
          %s288 = sand.u32 %s115, 1
          %s289 = scalar_lea.sflag [#allocation5], %s288
          %s290 = sand.u32 %s115, 1
          %s291 = scalar_lea.vmem [#allocation8], %s290
          %293 = dma.done %s289, 16
        $region52: #{tpu_custom_call.1} parent=47 // pred_fallthru
          _
      $region48: #{tpu_custom_call.1} parent=5 // pred_fallthru
        _
    $region6: #{tpu_custom_call.1} parent=1 // loop_footer
      %s21 = sadd.s32 1, %s17
    $region7: #{tpu_custom_call.1} parent=1 // loop_footer_branch
      %16 = sbr.rel target = $region3
    $region8: #{tpu_custom_call.1} parent=1 // loop_exit
      _
    %294 = vsyncpa [#allocation4], 1
    %s295 = scalar_lea.sflag [#allocation4], 1
    %296 = vsyncpa %s295, 1
    %297 = vsyncpa [#allocation5], 1
    %s298 = scalar_lea.sflag [#allocation5], 1
    %299 = vsyncpa %s298, 1
    %300 = vsyncpa [#allocation6], 1
    %s301 = scalar_lea.sflag [#allocation6], 1
    %302 = vsyncpa %s301, 1

</llo_original>
